<compile_context>
chip_gen: v7x
topology: tpu7x:2x2x1
jax: 0.10.0
libtpu: 0.0.40
codegen_flags: <defaults>
</compile_context>

<pallas_src>
import jax
import jax.numpy as jnp
from jax.experimental import pallas as pl
from jax.experimental.pallas import tpu as pltpu


def _round_up(a, b):
    return ((a + b - 1) // b) * b


def _make_mlp_kernel(out_dims, offsets):
    """Hidden matmul + ReLU + fused per-branch matmul (transposed layout)."""

    def kernel(x_ref, w1t_ref, b1_ref, wbt_ref, bb_ref, *out_refs):
        x = x_ref[...]                                       # (C_in, tile)
        h = jnp.dot(w1t_ref[...], x,
                    preferred_element_type=jnp.float32)      # (hidden, tile) MXU
        h = jnp.maximum(h + b1_ref[...], 0.0)                # bias + ReLU (VPU)
        o = jnp.dot(wbt_ref[...], h,
                    preferred_element_type=jnp.float32)      # (c_pad_sum, tile)
        o = o + bb_ref[...]
        for i, (off, c) in enumerate(zip(offsets, out_dims)):
            # off is a multiple of 8 -> sublane-aligned slice, straight store.
            out_refs[i][...] = o[off:off + c, :].astype(out_refs[i].dtype)

    return kernel


def _pick_tile_and_vmem(C_in, hidden_dim, c_pad_sum, N, P, tile_px):
    """Pixel-tile size from a VMEM budget + matching vmem_limit_bytes."""
    try:
        vmem_cap = int(pltpu.get_tpu_info().vmem_capacity_bytes)
    except Exception:  # non-TPU tracing / older API: be conservative (v7x TC)
        vmem_cap = 64 << 20

    # f32 bytes per pixel: double-buffered x / output blocks + the h and o
    # intermediates; plus the (double-buffered) resident weights.
    per_px = 4 * (2 * C_in + 2 * c_pad_sum + hidden_dim + c_pad_sum)
    resident = 4 * 2 * (hidden_dim * C_in + hidden_dim
                        + c_pad_sum * hidden_dim + c_pad_sum)

    if tile_px is None:
        budget = int(vmem_cap * 0.5)          # headroom for Mosaic scratch
        tile_px = (budget - resident) // max(per_px, 1)
        tile_px = min(tile_px, 32768)         # plenty to hide ~0.35us/step
    tile = max(128, (tile_px // 128) * 128)

    # Keep both v7x TensorCores busy even when the batch axis has one block.
    min_px_blocks = 2 if (N == 1 and P >= 256) else 1
    tile = min(tile, _round_up(-(-P // min_px_blocks), 128))
    if tile >= P:
        tile = P                              # full-extent block (always legal)

    vmem_limit = int(min(vmem_cap, per_px * tile + resident + (16 << 20)))
    vmem_limit = max(vmem_limit, min(vmem_cap, 32 << 20))
    return tile, vmem_limit


def two_layer_mlp_forward(x_nchw, params, *, tile_px=None):
    """Forward pass matching two_layer_mlp.forward.

    Args:
      x_nchw: (N, C_in, H, W) float32 input (PyTorch NCHW convention).
      params: dict with:
        'hidden_w': (C_in, hidden)   -- transposed 1x1-conv weight
        'hidden_b': (hidden,)
        'branches': {key: (w (hidden, C_out), b (C_out,))}
      tile_px: optional pixels-per-step override; by default sized from the
        chip's VMEM capacity.
    Returns:
      dict {key: (N, C_out, H, W)} float32.
    """
    N, C_in, H, W = x_nchw.shape
    hidden_w = params["hidden_w"]          # (C_in, hidden)
    hidden_b = params["hidden_b"]          # (hidden,)
    branches = params["branches"]
    hidden_dim = hidden_w.shape[1]

    branch_keys = list(branches.keys())
    out_dims = [branches[k][0].shape[1] for k in branch_keys]

    # Zero-pad each branch's row block to a multiple of 8 rows so every
    # per-branch slice inside the kernel is sublane-aligned for f32.
    SUB = 8
    offsets, padded = [], []
    off = 0
    for c in out_dims:
        offsets.append(off)
        cp = _round_up(c, SUB)
        padded.append(cp)
        off += cp
    c_pad_sum = off

    # Transposed ("lane-dense") operands: channels on sublanes, pixels on lanes.
    w1t = jnp.transpose(hidden_w)                       # (hidden, C_in)
    b1 = hidden_b.reshape(hidden_dim, 1)                # (hidden, 1)
    wb_rows, bb_rows = [], []
    for k, c, cp in zip(branch_keys, out_dims, padded):
        w, b = branches[k]                              # (hidden, c), (c,)
        wt = jnp.transpose(w)                           # (c, hidden)
        if cp != c:                                     # tiny weight-only pad
            wt = jnp.pad(wt, ((0, cp - c), (0, 0)))
            b = jnp.pad(b, (0, cp - c))
        wb_rows.append(wt)
        bb_rows.append(b)
    wbt = jnp.concatenate(wb_rows, axis=0)              # (c_pad_sum, hidden)
    bb = jnp.concatenate(bb_rows).reshape(c_pad_sum, 1)

    P = H * W
    tile, vmem_limit = _pick_tile_and_vmem(C_in, hidden_dim, c_pad_sum, N, P,
                                           tile_px)
    grid = (N, pl.cdiv(P, tile))                        # ragged last block OK

    x3 = x_nchw.reshape(N, C_in, P)                     # pure view, no padding

    in_specs = [
        pl.BlockSpec((None, C_in, tile), lambda n, p: (n, 0, p)),    # x block
        pl.BlockSpec((hidden_dim, C_in), lambda n, p: (0, 0)),       # W1^T (resident)
        pl.BlockSpec((hidden_dim, 1), lambda n, p: (0, 0)),          # b1
        pl.BlockSpec((c_pad_sum, hidden_dim), lambda n, p: (0, 0)),  # fused Wb^T
        pl.BlockSpec((c_pad_sum, 1), lambda n, p: (0, 0)),           # fused bb
    ]
    out_shapes = tuple(
        jax.ShapeDtypeStruct((N, c, P), jnp.float32) for c in out_dims)
    out_specs = [pl.BlockSpec((None, c, tile), lambda n, p: (n, 0, p))
                 for c in out_dims]

    kernel = _make_mlp_kernel(tuple(out_dims), tuple(offsets))

    outs = pl.pallas_call(
        kernel,
        out_shape=out_shapes,
        grid_spec=pltpu.PrefetchScalarGridSpec(
            num_scalar_prefetch=0,
            grid=grid,
            in_specs=in_specs,
            out_specs=out_specs,
        ),
        compiler_params=pltpu.CompilerParams(
            dimension_semantics=("parallel", "parallel"),
            vmem_limit_bytes=vmem_limit),
    )(x3, w1t, b1, wbt, bb)

    # Outputs are already NCHW-ordered and unpadded: just reshape.
    return {k: o.reshape(N, c, H, W)
            for k, c, o in zip(branch_keys, out_dims, outs)}


def init_params(key, input_dim, hidden_dim, feature_dim_dict):
    """Deterministic synthetic parameter init (shapes match nn.Conv2d 1x1)."""
    k1, k2 = jax.random.split(key)
    params = {
        # stored already-transposed: (C_in, hidden) so logically x @ W
        "hidden_w": jax.random.normal(k1, (input_dim, hidden_dim),
                                      jnp.float32) * 0.1,
        "hidden_b": jax.random.normal(k2, (hidden_dim,), jnp.float32) * 0.1,
        "branches": {},
    }
    for i, (name, feat_dim_chw) in enumerate(sorted(feature_dim_dict.items())):
        kw, kb = jax.random.split(jax.random.fold_in(key, i + 1))
        c_out = feat_dim_chw[0]
        params["branches"][name] = (
            jax.random.normal(kw, (hidden_dim, c_out), jnp.float32) * 0.1,
            jax.random.normal(kb, (c_out,), jnp.float32) * 0.1,
        )
    return params


def reference_forward(x_nchw, params):
    """Pure-JAX reference of the PyTorch forward (einsum 1x1 convs)."""
    h = jnp.einsum("nchw,cd->ndhw", x_nchw, params["hidden_w"])
    h = h + params["hidden_b"][None, :, None, None]
    h = jnp.maximum(h, 0.0)
    out = {}
    for key, (w, b) in params["branches"].items():
        o = jnp.einsum("ndhw,dk->nkhw", h, w) + b[None, :, None, None]
        out[key] = o
    return out


if __name__ == "__main__":
    key = jax.random.PRNGKey(0)

    # Small shapes consistent with the module's forward: NCHW input.
    N, C_in, H, W = 2, 4, 16, 16
    hidden_dim = 32
    feature_dim_dict = {"clip": (16, 1, 1), "dino": (8, 1, 1)}

    kx, kp = jax.random.split(key)
    x = jax.random.normal(kx, (N, C_in, H, W), jnp.float32)
    params = init_params(kp, C_in, hidden_dim, feature_dim_dict)

    out = two_layer_mlp_forward(x, params)
    out = jax.tree_util.tree_map(jax.block_until_ready, out)

    ref = reference_forward(x, params)
    for k in ref:
        assert out[k].shape == ref[k].shape, (k, out[k].shape, ref[k].shape)
        err = jnp.max(jnp.abs(out[k] - ref[k]))
        assert err < 1e-4, (k, float(err))

    # Second check: ragged last pixel block (P=200 with tile=128) and a
    # non-8-aligned branch width (3) -> exercises the masked boundary path
    # and the zero-row weight padding.
    N2, H2, W2 = 1, 10, 20
    feature_dim_dict2 = {"a": (3, 1, 1), "b": (8, 1, 1)}
    kx2, kp2 = jax.random.split(jax.random.fold_in(key, 7))
    x2 = jax.random.normal(kx2, (N2, C_in, H2, W2), jnp.float32)
    params2 = init_params(kp2, C_in, hidden_dim, feature_dim_dict2)
    out2 = two_layer_mlp_forward(x2, params2, tile_px=128)
    out2 = jax.tree_util.tree_map(jax.block_until_ready, out2)
    ref2 = reference_forward(x2, params2)
    for k in ref2:
        assert out2[k].shape == ref2[k].shape, (k, out2[k].shape, ref2[k].shape)
        err = jnp.max(jnp.abs(out2[k] - ref2[k]))
        assert err < 1e-4, (k, float(err))

    print("KERNEL_OK")
</pallas_src>

<mosaic_0001>
module attributes {stable_mosaic.version = 11 : i64} {
  func.func @kernel(%arg0: i32, %arg1: i32, %arg2: memref<1x4x256xf32, #tpu.memory_space<vmem>>, %arg3: memref<32x4xf32, #tpu.memory_space<vmem>>, %arg4: memref<32x1xf32, #tpu.memory_space<vmem>>, %arg5: memref<24x32xf32, #tpu.memory_space<vmem>>, %arg6: memref<24x1xf32, #tpu.memory_space<vmem>>, %arg7: memref<1x16x256xf32, #tpu.memory_space<vmem>>, %arg8: memref<1x8x256xf32, #tpu.memory_space<vmem>>) attributes {dimension_semantics = [#tpu.dimension_semantics<parallel>, #tpu.dimension_semantics<parallel>], iteration_bounds = array<i64: 2, 1>, scalar_prefetch = 0 : i64, scratch_operands = 0 : i64, tpu.core_type = #tpu.core_type<tc>, window_params = [{transform_indices = @transform_0, window_bounds = array<i64: 1, 4, 256>}, {pipeline_mode = #tpu.pipeline_mode<synchronous>, transform_indices = @transform_1, window_bounds = array<i64: 32, 4>}, {pipeline_mode = #tpu.pipeline_mode<synchronous>, transform_indices = @transform_2, window_bounds = array<i64: 32, 1>}, {pipeline_mode = #tpu.pipeline_mode<synchronous>, transform_indices = @transform_3, window_bounds = array<i64: 24, 32>}, {pipeline_mode = #tpu.pipeline_mode<synchronous>, transform_indices = @transform_4, window_bounds = array<i64: 24, 1>}, {transform_indices = @transform_5, window_bounds = array<i64: 1, 16, 256>}, {transform_indices = @transform_6, window_bounds = array<i64: 1, 8, 256>}]} {
    %c0 = arith.constant 0 : index
    %c0_0 = arith.constant 0 : index
    %c0_1 = arith.constant 0 : index
    %0 = vector.load %arg2[%c0, %c0_0, %c0_1] : memref<1x4x256xf32, #tpu.memory_space<vmem>>, vector<1x4x256xf32>
    %1 = vector.shape_cast %0 : vector<1x4x256xf32> to vector<4x256xf32>
    %c0_2 = arith.constant 0 : index
    %c0_3 = arith.constant 0 : index
    %2 = vector.load %arg3[%c0_2, %c0_3] : memref<32x4xf32, #tpu.memory_space<vmem>>, vector<32x4xf32>
    %cst = arith.constant dense<0.000000e+00> : vector<32x256xf32>
    %3 = tpu.matmul %2, %1, %cst {dimension_numbers = #tpu.dot_dimension_numbers<[1], [0], [0], [1], [0, 0, 1, 1], [], []>} : vector<32x4xf32>, vector<4x256xf32>, vector<32x256xf32> -> vector<32x256xf32>
    %c0_4 = arith.constant 0 : index
    %c0_5 = arith.constant 0 : index
    %4 = vector.load %arg4[%c0_4, %c0_5] : memref<32x1xf32, #tpu.memory_space<vmem>>, vector<32x1xf32>
    %5 = vector.broadcast %4 : vector<32x1xf32> to vector<32x256xf32>
    %6 = arith.addf %3, %5 : vector<32x256xf32>
    %cst_6 = arith.constant 0.000000e+00 : f32
    %7 = vector.broadcast %cst_6 : f32 to vector<32x256xf32>
    %8 = arith.maximumf %6, %7 : vector<32x256xf32>
    %c0_7 = arith.constant 0 : index
    %c0_8 = arith.constant 0 : index
    %9 = vector.load %arg5[%c0_7, %c0_8] : memref<24x32xf32, #tpu.memory_space<vmem>>, vector<24x32xf32>
    %cst_9 = arith.constant dense<0.000000e+00> : vector<24x256xf32>
    %10 = tpu.matmul %9, %8, %cst_9 {dimension_numbers = #tpu.dot_dimension_numbers<[1], [0], [0], [1], [0, 0, 1, 1], [], []>} : vector<24x32xf32>, vector<32x256xf32>, vector<24x256xf32> -> vector<24x256xf32>
    %c0_10 = arith.constant 0 : index
    %c0_11 = arith.constant 0 : index
    %11 = vector.load %arg6[%c0_10, %c0_11] : memref<24x1xf32, #tpu.memory_space<vmem>>, vector<24x1xf32>
    %12 = vector.broadcast %11 : vector<24x1xf32> to vector<24x256xf32>
    %13 = arith.addf %10, %12 : vector<24x256xf32>
    %14 = vector.extract_strided_slice %13 {offsets = [0, 0], sizes = [16, 256], strides = [1, 1]} : vector<24x256xf32> to vector<16x256xf32>
    %c0_12 = arith.constant 0 : index
    %c0_13 = arith.constant 0 : index
    %c0_14 = arith.constant 0 : index
    %15 = vector.load %arg7[%c0_12, %c0_13, %c0_14] : memref<1x16x256xf32, #tpu.memory_space<vmem>>, vector<1x16x256xf32>
    %16 = vector.shape_cast %15 : vector<1x16x256xf32> to vector<16x256xf32>
    %17 = vector.shape_cast %14 : vector<16x256xf32> to vector<1x16x256xf32>
    tpu.vector_store %arg7[%c0_12, %c0_13, %c0_14], %17 {strides = array<i32>} : memref<1x16x256xf32, #tpu.memory_space<vmem>>, vector<1x16x256xf32>,
    %18 = vector.extract_strided_slice %13 {offsets = [16, 0], sizes = [8, 256], strides = [1, 1]} : vector<24x256xf32> to vector<8x256xf32>
    %c0_15 = arith.constant 0 : index
    %c0_16 = arith.constant 0 : index
    %c0_17 = arith.constant 0 : index
    %19 = vector.load %arg8[%c0_15, %c0_16, %c0_17] : memref<1x8x256xf32, #tpu.memory_space<vmem>>, vector<1x8x256xf32>
    %20 = vector.shape_cast %19 : vector<1x8x256xf32> to vector<8x256xf32>
    %21 = vector.shape_cast %18 : vector<8x256xf32> to vector<1x8x256xf32>
    tpu.vector_store %arg8[%c0_15, %c0_16, %c0_17], %21 {strides = array<i32>} : memref<1x8x256xf32, #tpu.memory_space<vmem>>, vector<1x8x256xf32>,
    return
  }
  func.func @transform_0(%arg0: i32, %arg1: i32) -> (i32, i32, i32) {
    %c0_i32 = arith.constant 0 : i32
    %c0_i32_0 = arith.constant 0 : i32
    return %arg0, %c0_i32, %arg1 : i32, i32, i32
  }
  func.func @transform_1(%arg0: i32, %arg1: i32) -> (i32, i32) {
    %c0_i32 = arith.constant 0 : i32
    %c0_i32_0 = arith.constant 0 : i32
    %c0_i32_1 = arith.constant 0 : i32
    return %c0_i32, %c0_i32_0 : i32, i32
  }
  func.func @transform_2(%arg0: i32, %arg1: i32) -> (i32, i32) {
    %c0_i32 = arith.constant 0 : i32
    %c0_i32_0 = arith.constant 0 : i32
    %c0_i32_1 = arith.constant 0 : i32
    return %c0_i32, %c0_i32_0 : i32, i32
  }
  func.func @transform_3(%arg0: i32, %arg1: i32) -> (i32, i32) {
    %c0_i32 = arith.constant 0 : i32
    %c0_i32_0 = arith.constant 0 : i32
    %c0_i32_1 = arith.constant 0 : i32
    return %c0_i32, %c0_i32_0 : i32, i32
  }
  func.func @transform_4(%arg0: i32, %arg1: i32) -> (i32, i32) {
    %c0_i32 = arith.constant 0 : i32
    %c0_i32_0 = arith.constant 0 : i32
    %c0_i32_1 = arith.constant 0 : i32
    return %c0_i32, %c0_i32_0 : i32, i32
  }
  func.func @transform_5(%arg0: i32, %arg1: i32) -> (i32, i32, i32) {
    %c0_i32 = arith.constant 0 : i32
    %c0_i32_0 = arith.constant 0 : i32
    return %arg0, %c0_i32, %arg1 : i32, i32, i32
  }
  func.func @transform_6(%arg0: i32, %arg1: i32) -> (i32, i32, i32) {
    %c0_i32 = arith.constant 0 : i32
    %c0_i32_0 = arith.constant 0 : i32
    return %arg0, %c0_i32, %arg1 : i32, i32, i32
  }
}

</mosaic_0001>

<llo_original>
// kernel: tpu_custom_call.1
$region0: #{tpu_custom_call.1}
  #allocation0 [shape = 'u32[]', space=smem, size = 0x4, offset = 0x4, fixed_abs, tag = 'smem constant byte address 0x4 - core index']
  #allocation1 [shape = 'u32[144,128]{1,0:T(1,128)}', space=vmem, size = 0x12000, scoped, tag = 'internal scratch']
  %s0 = inlined_call_operand.vmem [shape: f32[2,4,256], index: 0, kind: input, shape index: {}]
  %s1 = inlined_call_operand.vmem [shape: f32[32,4], index: 1, kind: input, shape index: {}]
  %s2 = inlined_call_operand.vmem [shape: f32[32,1], index: 2, kind: input, shape index: {}]
  %s3 = inlined_call_operand.vmem [shape: f32[24,32], index: 3, kind: input, shape index: {}]
  %s4 = inlined_call_operand.vmem [shape: f32[24,1], index: 4, kind: input, shape index: {}]
  %s5 = inlined_call_operand.hbm [shape: f32[2,16,256], index: 5, kind: output, shape index: {0}]
  %s6 = inlined_call_operand.hbm [shape: f32[2,8,256], index: 6, kind: output, shape index: {1}]
  %7 = xla_tuple %s5, %s6
  %s8 = sld [smem:[#allocation0]]
  $region61: #{tpu_custom_call.1} parent=0
    _
  %s10 = ssub.s32 1, %s8
  %s11 = scalar_select 0, %s10, %s8
  $region1: #{tpu_custom_call.1} parent=0
    #allocation2 [shape = 'u8[32768]{0}', space=vmem, size = 0x8000, scoped, tag = 'output window, operand 0']
    #allocation3 [shape = 's32[2]{0}', space=sflag, size = 0x8, scoped, tag = 'scoped memory for tpu_custom_call.1']
    #allocation4 [shape = 'u8[16384]{0}', space=vmem, size = 0x4000, scoped, tag = 'output window, operand 1']
    #allocation5 [shape = 's32[2]{0}', space=sflag, size = 0x8, scoped, tag = 'scoped memory for tpu_custom_call.1']
    %12 = vsyncpa [#allocation3], 0
    %s13 = scalar_lea.sflag [#allocation3], 1
    %14 = vsyncpa %s13, 0
    %15 = vsyncpa [#allocation5], 0
    %s16 = scalar_lea.sflag [#allocation5], 1
    %17 = vsyncpa %s16, 0
    loop: start=0, step=1, limit=4
    $region2: #{tpu_custom_call.1} parent=1 // loop_pre_header
      _
    $region3: #{tpu_custom_call.1} parent=1 // loop_header
      %s19 = sphi 0, %s23
      %p20 = scmp.ge.s32.totalorder %s19, 4
      %s26 = sphi 0, %s38
      %s27 = sphi 0, %s34
      %s28 = sphi 0, %s26
      %s29 = sphi 0, %s27
      %s30 = sphi 0, %s28
      %s31 = sphi 0, %s29
      %s43 = sphi 0, %s45
      %s46 = sphi 0, %s43
      %s47 = sphi 0, %s46
      %s63 = sphi 0, %s47
      %s67 = sphi 0, %s67
      %s69 = sphi 0, %s67
      %s70 = sphi 0, %s69
      %s84 = sphi 0, %s70
      %s88 = sphi 0, %s88
      %s90 = sphi 0, %s88
      %s91 = sphi 0, %s90
      %s105 = sphi 0, %s91
      %s109 = sphi 0, %s109
      %s111 = sphi 0, %s109
      %s112 = sphi 0, %s111
      %s126 = sphi 0, %s112
      %s130 = sphi 0, %s130
      %s132 = sphi 0, %s130
      %s133 = sphi 0, %s132
      %s147 = sphi 0, %s133
      %s155 = sphi 0, %s157
      %s158 = sphi 0, %s155
      %s159 = sphi 0, %s158
      %s175 = sphi 0, %s159
      %s183 = sphi 0, %s185
      %s186 = sphi 0, %s183
      %s187 = sphi 0, %s186
      %s203 = sphi 0, %s187
    $region4: #{tpu_custom_call.1} parent=1 // loop_header_branch
      %22 = sbr.rel (%p20) target = $region8
    $region5: #{tpu_custom_call.1} parent=1 // loop_body
      %s24 = ssub.s32 %s19, 1
      %s25 = ssub.s32 %s19, 2
      %s32 = sadd.s32 1, %s27
      %p33 = scmp.ge.s32.totalorder %s32, 1
      %s34 = scalar_select %p33, 0, %s32
      %s35 = sadd.s32 1, %s26
      %s36 = scalar_select %p33, %s35, %s26
      %p37 = scmp.ge.s32.totalorder %s36, 2
      %s38 = scalar_select %p37, 0, %s36
      %s39 = ssub.s32 %s26, %s38
      %s40 = ssub.s32 %s27, %s34
      %s41 = sor.u32 %s39, %s40
      %p42 = scmp.eq.s32.totalorder %s41, 0
      %s44 = sadd.s32 %s43, 1
      %s45 = scalar_select %p42, %s43, %s44
      %p48 = pneg %p42
      %p49 = scmp.eq.s32.totalorder %s19, 1
      %p50 = por %p48, %p49
      %p51 = scmp.ne.s32.totalorder %s43, %s46
      %p52 = scmp.eq.s32.totalorder %s19, 0
      %p53 = por %p51, %p52
      %p54 = scmp.ne.s32.totalorder %s43, %s46
      %p55 = scmp.eq.s32.totalorder %s24, 1
      %p56 = por %p54, %p55
      %p57 = scmp.ne.s32.totalorder %s46, %s47
      %p58 = scmp.eq.s32.totalorder %s24, 0
      %p59 = por %p57, %p58
      %p60 = scmp.ne.s32.totalorder %s46, %s47
      %p61 = scmp.eq.s32.totalorder %s25, 1
      %p62 = por %p60, %p61
      %p64 = scmp.ne.s32.totalorder %s47, %s63
      %p65 = scmp.eq.s32.totalorder %s25, 0
      %p66 = por %p64, %p65
      %s68 = sadd.s32 %s67, 1
      %p71 = scmp.eq.s32.totalorder %s19, 1
      %p72 = scmp.ne.s32.totalorder %s67, %s69
      %p73 = scmp.eq.s32.totalorder %s19, 0
      %p74 = por %p72, %p73
      %p75 = scmp.ne.s32.totalorder %s67, %s69
      %p76 = scmp.eq.s32.totalorder %s24, 1
      %p77 = por %p75, %p76
      %p78 = scmp.ne.s32.totalorder %s69, %s70
      %p79 = scmp.eq.s32.totalorder %s24, 0
      %p80 = por %p78, %p79
      %p81 = scmp.ne.s32.totalorder %s69, %s70
      %p82 = scmp.eq.s32.totalorder %s25, 1
      %p83 = por %p81, %p82
      %p85 = scmp.ne.s32.totalorder %s70, %s84
      %p86 = scmp.eq.s32.totalorder %s25, 0
      %p87 = por %p85, %p86
      %s89 = sadd.s32 %s88, 1
      %p92 = scmp.eq.s32.totalorder %s19, 1
      %p93 = scmp.ne.s32.totalorder %s88, %s90
      %p94 = scmp.eq.s32.totalorder %s19, 0
      %p95 = por %p93, %p94
      %p96 = scmp.ne.s32.totalorder %s88, %s90
      %p97 = scmp.eq.s32.totalorder %s24, 1
      %p98 = por %p96, %p97
      %p99 = scmp.ne.s32.totalorder %s90, %s91
      %p100 = scmp.eq.s32.totalorder %s24, 0
      %p101 = por %p99, %p100
      %p102 = scmp.ne.s32.totalorder %s90, %s91
      %p103 = scmp.eq.s32.totalorder %s25, 1
      %p104 = por %p102, %p103
      %p106 = scmp.ne.s32.totalorder %s91, %s105
      %p107 = scmp.eq.s32.totalorder %s25, 0
      %p108 = por %p106, %p107
      %s110 = sadd.s32 %s109, 1
      %p113 = scmp.eq.s32.totalorder %s19, 1
      %p114 = scmp.ne.s32.totalorder %s109, %s111
      %p115 = scmp.eq.s32.totalorder %s19, 0
      %p116 = por %p114, %p115
      %p117 = scmp.ne.s32.totalorder %s109, %s111
      %p118 = scmp.eq.s32.totalorder %s24, 1
      %p119 = por %p117, %p118
      %p120 = scmp.ne.s32.totalorder %s111, %s112
      %p121 = scmp.eq.s32.totalorder %s24, 0
      %p122 = por %p120, %p121
      %p123 = scmp.ne.s32.totalorder %s111, %s112
      %p124 = scmp.eq.s32.totalorder %s25, 1
      %p125 = por %p123, %p124
      %p127 = scmp.ne.s32.totalorder %s112, %s126
      %p128 = scmp.eq.s32.totalorder %s25, 0
      %p129 = por %p127, %p128
      %s131 = sadd.s32 %s130, 1
      %p134 = scmp.eq.s32.totalorder %s19, 1
      %p135 = scmp.ne.s32.totalorder %s130, %s132
      %p136 = scmp.eq.s32.totalorder %s19, 0
      %p137 = por %p135, %p136
      %p138 = scmp.ne.s32.totalorder %s130, %s132
      %p139 = scmp.eq.s32.totalorder %s24, 1
      %p140 = por %p138, %p139
      %p141 = scmp.ne.s32.totalorder %s132, %s133
      %p142 = scmp.eq.s32.totalorder %s24, 0
      %p143 = por %p141, %p142
      %p144 = scmp.ne.s32.totalorder %s132, %s133
      %p145 = scmp.eq.s32.totalorder %s25, 1
      %p146 = por %p144, %p145
      %p148 = scmp.ne.s32.totalorder %s133, %s147
      %p149 = scmp.eq.s32.totalorder %s25, 0
      %p150 = por %p148, %p149
      %s151 = ssub.s32 %s26, %s38
      %s152 = ssub.s32 %s27, %s34
      %s153 = sor.u32 %s151, %s152
      %p154 = scmp.eq.s32.totalorder %s153, 0
      %s156 = sadd.s32 %s155, 1
      %s157 = scalar_select %p154, %s155, %s156
      %p160 = pneg %p154
      %p161 = scmp.eq.s32.totalorder %s19, 1
      %p162 = por %p160, %p161
      %p163 = scmp.ne.s32.totalorder %s155, %s158
      %p164 = scmp.eq.s32.totalorder %s19, 0
      %p165 = por %p163, %p164
      %p166 = scmp.ne.s32.totalorder %s155, %s158
      %p167 = scmp.eq.s32.totalorder %s24, 1
      %p168 = por %p166, %p167
      %p169 = scmp.ne.s32.totalorder %s158, %s159
      %p170 = scmp.eq.s32.totalorder %s24, 0
      %p171 = por %p169, %p170
      %p172 = scmp.ne.s32.totalorder %s158, %s159
      %p173 = scmp.eq.s32.totalorder %s25, 1
      %p174 = por %p172, %p173
      %p176 = scmp.ne.s32.totalorder %s159, %s175
      %p177 = scmp.eq.s32.totalorder %s25, 0
      %p178 = por %p176, %p177
      %s179 = ssub.s32 %s26, %s38
      %s180 = ssub.s32 %s27, %s34
      %s181 = sor.u32 %s179, %s180
      %p182 = scmp.eq.s32.totalorder %s181, 0
      %s184 = sadd.s32 %s183, 1
      %s185 = scalar_select %p182, %s183, %s184
      %p188 = pneg %p182
      %p189 = scmp.eq.s32.totalorder %s19, 1
      %p190 = por %p188, %p189
      %p191 = scmp.ne.s32.totalorder %s183, %s186
      %p192 = scmp.eq.s32.totalorder %s19, 0
      %p193 = por %p191, %p192
      %p194 = scmp.ne.s32.totalorder %s183, %s186
      %p195 = scmp.eq.s32.totalorder %s24, 1
      %p196 = por %p194, %p195
      %p197 = scmp.ne.s32.totalorder %s186, %s187
      %p198 = scmp.eq.s32.totalorder %s24, 0
      %p199 = por %p197, %p198
      %p200 = scmp.ne.s32.totalorder %s186, %s187
      %p201 = scmp.eq.s32.totalorder %s25, 1
      %p202 = por %p200, %p201
      %p204 = scmp.ne.s32.totalorder %s187, %s203
      %p205 = scmp.eq.s32.totalorder %s25, 0
      %p206 = por %p204, %p205
      %p207 = scmp.le.s32.totalorder 1, %s19
      %p208 = scmp.lt.s32.totalorder %s19, 3
      %p209 = pnand %p207, %p208
      %p210 = pneg %p209
      // Predicated region
      $region9: #{tpu_custom_call.1} parent=5 // pred_check
        _
      $region10: #{tpu_custom_call.1} parent=5 // pred_check_branch
        %212 = sbr.rel (%p209) target = $region12
      $region11: #{tpu_custom_call.1} parent=5 // pred_region
        %s213 = ssub.s32 %s19, 1
        // Predicated region
        $region13: #{tpu_custom_call.1} parent=11 // pred_check
          %p214 = pneg %p80
        $region14: #{tpu_custom_call.1} parent=11 // pred_check_branch
          %216 = sbr.rel (%p214) target = $region16
        $region15: #{tpu_custom_call.1} parent=11 // pred_region
          _
        $region16: #{tpu_custom_call.1} parent=11 // pred_fallthru
          _
        // Predicated region
        $region17: #{tpu_custom_call.1} parent=11 // pred_check
          %p217 = pneg %p101
        $region18: #{tpu_custom_call.1} parent=11 // pred_check_branch
          %219 = sbr.rel (%p217) target = $region20
        $region19: #{tpu_custom_call.1} parent=11 // pred_region
          _
        $region20: #{tpu_custom_call.1} parent=11 // pred_fallthru
          _
        // Predicated region
        $region21: #{tpu_custom_call.1} parent=11 // pred_check
          %p220 = pneg %p122
        $region22: #{tpu_custom_call.1} parent=11 // pred_check_branch
          %222 = sbr.rel (%p220) target = $region24
        $region23: #{tpu_custom_call.1} parent=11 // pred_region
          _
        $region24: #{tpu_custom_call.1} parent=11 // pred_fallthru
          _
        // Predicated region
        $region25: #{tpu_custom_call.1} parent=11 // pred_check
          %p223 = pneg %p143
        $region26: #{tpu_custom_call.1} parent=11 // pred_check_branch
          %225 = sbr.rel (%p223) target = $region28
        $region27: #{tpu_custom_call.1} parent=11 // pred_region
          _
        $region28: #{tpu_custom_call.1} parent=11 // pred_fallthru
          _
      $region12: #{tpu_custom_call.1} parent=5 // pred_fallthru
        _
      %p226 = scmp.lt.s32.totalorder %s19, 2
      // Predicated region
      $region29: #{tpu_custom_call.1} parent=5 // pred_check
        %p227 = pneg %p226
      $region30: #{tpu_custom_call.1} parent=5 // pred_check_branch
        %229 = sbr.rel (%p227) target = $region32
      $region31: #{tpu_custom_call.1} parent=5 // pred_region
        // Predicated region
        $region33: #{tpu_custom_call.1} parent=31 // pred_check
          %p230 = pneg %p53
        $region34: #{tpu_custom_call.1} parent=31 // pred_check_branch
          %232 = sbr.rel (%p230) target = $region36
        $region35: #{tpu_custom_call.1} parent=31 // pred_region
          %s233 = smul.u32 2, %s27
          %p234 = scmp.lt.s32.totalorder %s26, 1
          %s235 = scalar_select %p234, %s26, 1
          %p236 = scmp.lt.s32.totalorder %s233, 1
          %s237 = scalar_select %p236, %s233, 1
          %s238 = smul.addr %s235, 2
          %s239 = sadd.s32 %s237, %s238
          %s240 = smul.addr %s239, 4
          %s241 = scalar_lea.vmem %s0, %s240
          %s242 = smul.u32 2, %s27
        $region36: #{tpu_custom_call.1} parent=31 // pred_fallthru
          _
      $region32: #{tpu_custom_call.1} parent=5 // pred_fallthru
        _
      %p243 = scmp.le.s32.totalorder 1, %s19
      %p244 = scmp.lt.s32.totalorder %s19, 3
      %p245 = pnand %p243, %p244
      %p246 = pneg %p245
      // Predicated region
      $region37: #{tpu_custom_call.1} parent=5 // pred_check
        _
      $region38: #{tpu_custom_call.1} parent=5 // pred_check_branch
        %248 = sbr.rel (%p245) target = $region40
      $region39: #{tpu_custom_call.1} parent=5 // pred_region
        %s249 = ssub.s32 %s19, 1
        %s250 = smul.u32 2, %s29
        %p251 = scmp.lt.s32.totalorder %s28, 1
        %s252 = scalar_select %p251, %s28, 1
        %p253 = scmp.lt.s32.totalorder %s250, 1
        %s254 = scalar_select %p253, %s250, 1
        %s255 = smul.addr %s252, 2
        %s256 = sadd.s32 %s254, %s255
        %s257 = smul.addr %s256, 4
        %s258 = scalar_lea.vmem %s0, %s257
        %p259 = pneg %p59
        %p260 = pneg %p56
        %p261 = pneg %p80
        %p262 = pneg %p77
        %p263 = pneg %p101
        %p264 = pneg %p98
        %p265 = pneg %p122
        %p266 = pneg %p119
        %p267 = pneg %p143
        %p268 = pneg %p140
        %p269 = pneg %p171
        %p270 = pneg %p168
        %s271 = sand.u32 %s158, 1
        %s272 = scalar_lea.sflag [#allocation3], %s271
        %s273 = sand.u32 %s158, 1
        %s274 = smul.addr %s273, 32
        %s275 = scalar_lea.vmem [#allocation2], %s274
        %p276 = pneg %p199
        %p277 = pneg %p196
        %s278 = sand.u32 %s186, 1
        %s279 = scalar_lea.sflag [#allocation5], %s278
        %s280 = sand.u32 %s186, 1
        %s281 = smul.addr %s280, 16
        %s282 = scalar_lea.vmem [#allocation4], %s281
        %s283 = smul.u32 2, %s29
        %p284 = scmp.lt.s32.totalorder %s28, 1
        %s285 = scalar_select %p284, %s28, 1
        %p286 = scmp.lt.s32.totalorder %s283, 1
        %s287 = scalar_select %p286, %s283, 1
        %s288 = smul.addr %s285, 2
        %s289 = sadd.s32 %s287, %s288
        %s290 = smul.addr %s289, 4
        %s291 = scalar_lea.vmem %s0, %s290
        %s292 = smul.u32 2, %s29
        %s293 = smul.u32 2, %s29
        %s294 = smul.u32 2, %s29
        %v295 = vld [vmem:[%s291] sm:$0xff]
        %v296 = vld [vmem:[%s1] sm:$0xff]
        %v297 = vld [vmem:[%s1 + $0x8] sm:$0xff]
        %v298 = vld [vmem:[%s1 + $0x10] sm:$0xff]
        %v299 = vld [vmem:[%s1 + $0x18] sm:$0xff]
        %v300 = vld [vmem:[%s2] sm:$0xff]
        %v301 = vld [vmem:[%s2 + $0x8] sm:$0xff]
        %v302 = vld [vmem:[%s2 + $0x10] sm:$0xff]
        %v303 = vld [vmem:[%s2 + $0x18] sm:$0xff]
        %305 = vset.pattern.permute.xlu0 0
        %306 = vperm.xlu0 %305, %v300
        %v307 = vpop.permute.xlu0 %306
        %310 = vset.pattern.permute.xlu0 0
        %311 = vperm.xlu0 %310, %v301
        %v312 = vpop.permute.xlu0 %311
        %315 = vset.pattern.permute.xlu0 0
        %316 = vperm.xlu0 %315, %v302
        %v317 = vpop.permute.xlu0 %316
        %320 = vset.pattern.permute.xlu0 0
        %321 = vperm.xlu0 %320, %v303
        %v322 = vpop.permute.xlu0 %321
        %v325 = vcombine.high %v295, %v295
        %vm326 = vcmask 31744
        %v328 = vsel %vm326, %v296, 0
        %v331 = vsel %vm326, %v297, 0
        %v334 = vsel %vm326, %v298, 0
        %v337 = vsel %vm326, %v299, 0
        %vm339 = vcmask 1043456
        %v340 = vsel %vm339, %v295, 0
        %v342 = vsel %vm339, %v325, 0
        %344 = vmatprep.subr.mxu0 %v342
        %345 = vmatpush1.msra.mxu0 %v340
        %346 = vmatprep.subr.mxu0 0.0
        %347 = vmatpush1.msra.mxu0 0.0
        %348 = vmatprep.subr.mxu0 0.0
        %349 = vmatpush1.msra.mxu0 0.0
        %350 = vmatprep.subr.mxu0 0.0
        %351 = vmatpush1.msra.mxu0 0.0
        %352 = vmatprep.subr.mxu0 0.0
        %353 = vmatpush1.msra.mxu0 0.0
        %354 = vmatprep.subr.mxu0 0.0
        %355 = vmatpush1.msra.mxu0 0.0
        %356 = vmatprep.subr.mxu0 0.0
        %357 = vmatpush1.msra.mxu0 0.0
        %358 = vmatprep.subr.mxu0 0.0
        %359 = vmatpush1.msra.mxu0 0.0
        %360 = vmatprep.subr.mxu0 0.0
        %361 = vmatpush1.msra.mxu0 0.0
        %362 = vmatprep.subr.mxu0 0.0
        %363 = vmatpush1.msra.mxu0 0.0
        %364 = vmatprep.subr.mxu0 0.0
        %365 = vmatpush1.msra.mxu0 0.0
        %366 = vmatprep.subr.mxu0 0.0
        %367 = vmatpush1.msra.mxu0 0.0
        %368 = vmatprep.subr.mxu0 0.0
        %369 = vmatpush1.msra.mxu0 0.0
        %370 = vmatprep.subr.mxu0 0.0
        %371 = vmatpush1.msra.mxu0 0.0
        %372 = vmatprep.subr.mxu0 0.0
        %373 = vmatpush1.msra.mxu0 0.0
        %374 = vmatprep.subr.mxu0 0.0
        %375 = vmatpush1.msra.mxu0 0.0
        %376 = vmatprep.subr.mxu0 0.0
        %377 = vmatpush1.msra.mxu0 0.0
        %378 = vmatprep.subr.mxu0 0.0
        %379 = vmatpush1.msra.mxu0 0.0
        %380 = vmatprep.subr.mxu0 0.0
        %381 = vmatpush1.msra.mxu0 0.0
        %382 = vmatprep.subr.mxu0 0.0
        %383 = vmatpush1.msra.mxu0 0.0
        %384 = vmatprep.subr.mxu0 0.0
        %385 = vmatpush1.msra.mxu0 0.0
        %386 = vmatprep.subr.mxu0 0.0
        %387 = vmatpush1.msra.mxu0 0.0
        %388 = vmatprep.subr.mxu0 0.0
        %389 = vmatpush1.msra.mxu0 0.0
        %390 = vmatprep.subr.mxu0 0.0
        %391 = vmatpush1.msra.mxu0 0.0
        %392 = vmatprep.subr.mxu0 0.0
        %393 = vmatpush1.msra.mxu0 0.0
        %394 = vmatprep.subr.mxu0 0.0
        %395 = vmatpush1.msra.mxu0 0.0
        %396 = vmatprep.subr.mxu0 0.0
        %397 = vmatpush1.msra.mxu0 0.0
        %398 = vmatprep.subr.mxu0 0.0
        %399 = vmatpush1.msra.mxu0 0.0
        %400 = vmatprep.subr.mxu0 0.0
        %401 = vmatpush1.msra.mxu0 0.0
        %402 = vmatprep.subr.mxu0 0.0
        %403 = vmatpush1.msra.mxu0 0.0
        %404 = vmatprep.subr.mxu0 0.0
        %405 = vmatpush1.msra.mxu0 0.0
        %406 = vmatprep.subr.mxu0 0.0
        %407 = vmatpush1.msra.mxu0 0.0
        %408 = vmatprep.mubr.f32.mxu0 0.0
        %409 = vmatmul.mubr.f32.gmra.mrb[0].mxu0 %v328
        %v410 = vpop.f32.mrb[0].mxu0
        %v411 = vadd.f32 %v307, %v410
        %v412 = vpop.f32.mrb[0].mxu0
        %v413 = vadd.f32 %v307, %v412
        %414 = vmatprep.mubr.f32.mxu0 0.0
        %415 = vmatmul.mubr.f32.gmra.mrb[0].mxu0 %v331
        %v416 = vpop.f32.mrb[0].mxu0
        %v417 = vadd.f32 %v312, %v416
        %v418 = vpop.f32.mrb[0].mxu0
        %v419 = vadd.f32 %v312, %v418
        %420 = vmatprep.mubr.f32.mxu0 0.0
        %421 = vmatmul.mubr.f32.gmra.mrb[0].mxu0 %v334
        %v422 = vpop.f32.mrb[0].mxu0
        %v423 = vadd.f32 %v317, %v422
        %v424 = vpop.f32.mrb[0].mxu0
        %v425 = vadd.f32 %v317, %v424
        %426 = vmatprep.mubr.f32.mxu0 0.0
        %427 = vmatmul.mubr.f32.gmra.mrb[0].mxu0 %v337
        %v428 = vpop.f32.mrb[0].mxu0
        %v429 = vadd.f32 %v322, %v428
        %v430 = vpop.f32.mrb[0].mxu0
        %v431 = vadd.f32 %v322, %v430
        %432 = vdwg.mxu0
        %v433 = vmax.f32 %v411, 0.0
        %v434 = vmax.f32 %v413, 0.0
        %v435 = vmax.f32 %v417, 0.0
        %v436 = vmax.f32 %v419, 0.0
        %v437 = vmax.f32 %v423, 0.0
        %v438 = vmax.f32 %v425, 0.0
        %v439 = vmax.f32 %v429, 0.0
        %v440 = vmax.f32 %v431, 0.0
        %v441 = vld [vmem:[%s3] sm:$0xff]
        %v442 = vld [vmem:[%s3 + $0x8] sm:$0xff]
        %v443 = vld [vmem:[%s3 + $0x10] sm:$0xff]
        %v444 = vld [vmem:[%s4] sm:$0xff]
        %v445 = vld [vmem:[%s4 + $0x8] sm:$0xff]
        %v446 = vld [vmem:[%s4 + $0x10] sm:$0xff]
        %448 = vset.pattern.permute.xlu0 0
        %449 = vperm.xlu0 %448, %v444
        %v450 = vpop.permute.xlu0 %449
        %453 = vset.pattern.permute.xlu0 0
        %454 = vperm.xlu0 %453, %v445
        %v455 = vpop.permute.xlu0 %454
        %458 = vset.pattern.permute.xlu0 0
        %459 = vperm.xlu0 %458, %v446
        %v460 = vpop.permute.xlu0 %459
        %vm462 = vcmask 261120
        %v464 = vsel %vm462, %v441, 0
        %v467 = vsel %vm462, %v442, 0
        %v470 = vsel %vm462, %v443, 0
        %472 = vmatprep.subr.mxu0 %v434
        %473 = vmatpush1.msra.mxu0 %v433
        %474 = vmatprep.subr.mxu0 %v436
        %475 = vmatpush1.msra.mxu0 %v435
        %476 = vmatprep.subr.mxu0 %v438
        %477 = vmatpush1.msra.mxu0 %v437
        %478 = vmatprep.subr.mxu0 %v440
        %479 = vmatpush1.msra.mxu0 %v439
        %480 = vmatprep.subr.mxu0 0.0
        %481 = vmatpush1.msra.mxu0 0.0
        %482 = vmatprep.subr.mxu0 0.0
        %483 = vmatpush1.msra.mxu0 0.0
        %484 = vmatprep.subr.mxu0 0.0
        %485 = vmatpush1.msra.mxu0 0.0
        %486 = vmatprep.subr.mxu0 0.0
        %487 = vmatpush1.msra.mxu0 0.0
        %488 = vmatprep.subr.mxu0 0.0
        %489 = vmatpush1.msra.mxu0 0.0
        %490 = vmatprep.subr.mxu0 0.0
        %491 = vmatpush1.msra.mxu0 0.0
        %492 = vmatprep.subr.mxu0 0.0
        %493 = vmatpush1.msra.mxu0 0.0
        %494 = vmatprep.subr.mxu0 0.0
        %495 = vmatpush1.msra.mxu0 0.0
        %496 = vmatprep.subr.mxu0 0.0
        %497 = vmatpush1.msra.mxu0 0.0
        %498 = vmatprep.subr.mxu0 0.0
        %499 = vmatpush1.msra.mxu0 0.0
        %500 = vmatprep.subr.mxu0 0.0
        %501 = vmatpush1.msra.mxu0 0.0
        %502 = vmatprep.subr.mxu0 0.0
        %503 = vmatpush1.msra.mxu0 0.0
        %504 = vmatprep.subr.mxu0 0.0
        %505 = vmatpush1.msra.mxu0 0.0
        %506 = vmatprep.subr.mxu0 0.0
        %507 = vmatpush1.msra.mxu0 0.0
        %508 = vmatprep.subr.mxu0 0.0
        %509 = vmatpush1.msra.mxu0 0.0
        %510 = vmatprep.subr.mxu0 0.0
        %511 = vmatpush1.msra.mxu0 0.0
        %512 = vmatprep.subr.mxu0 0.0
        %513 = vmatpush1.msra.mxu0 0.0
        %514 = vmatprep.subr.mxu0 0.0
        %515 = vmatpush1.msra.mxu0 0.0
        %516 = vmatprep.subr.mxu0 0.0
        %517 = vmatpush1.msra.mxu0 0.0
        %518 = vmatprep.subr.mxu0 0.0
        %519 = vmatpush1.msra.mxu0 0.0
        %520 = vmatprep.subr.mxu0 0.0
        %521 = vmatpush1.msra.mxu0 0.0
        %522 = vmatprep.subr.mxu0 0.0
        %523 = vmatpush1.msra.mxu0 0.0
        %524 = vmatprep.subr.mxu0 0.0
        %525 = vmatpush1.msra.mxu0 0.0
        %526 = vmatprep.subr.mxu0 0.0
        %527 = vmatpush1.msra.mxu0 0.0
        %528 = vmatprep.subr.mxu0 0.0
        %529 = vmatpush1.msra.mxu0 0.0
        %530 = vmatprep.subr.mxu0 0.0
        %531 = vmatpush1.msra.mxu0 0.0
        %532 = vmatprep.subr.mxu0 0.0
        %533 = vmatpush1.msra.mxu0 0.0
        %534 = vmatprep.subr.mxu0 0.0
        %535 = vmatpush1.msra.mxu0 0.0
        %536 = vmatprep.mubr.f32.mxu0 0.0
        %537 = vmatmul.mubr.f32.gmra.mrb[0].mxu0 %v464
        %v538 = vpop.f32.mrb[0].mxu0
        %v539 = vadd.f32 %v450, %v538
        %v540 = vpop.f32.mrb[0].mxu0
        %v541 = vadd.f32 %v450, %v540
        %542 = vmatprep.mubr.f32.mxu0 0.0
        %543 = vmatmul.mubr.f32.gmra.mrb[0].mxu0 %v467
        %v544 = vpop.f32.mrb[0].mxu0
        %v545 = vadd.f32 %v455, %v544
        %v546 = vpop.f32.mrb[0].mxu0
        %v547 = vadd.f32 %v455, %v546
        %548 = vmatprep.mubr.f32.mxu0 0.0
        %549 = vmatmul.mubr.f32.gmra.mrb[0].mxu0 %v470
        %v550 = vpop.f32.mrb[0].mxu0
        %v551 = vadd.f32 %v460, %v550
        %v552 = vpop.f32.mrb[0].mxu0
        %v553 = vadd.f32 %v460, %v552
        %554 = vdwg.mxu0
        %555 = vst [vmem:[%s275] sm:$0xff] %v539
        %556 = vst [vmem:[%s275 + $0x8] sm:$0xff] %v541
        %557 = vst [vmem:[%s275 + $0x10] sm:$0xff] %v545
        %558 = vst [vmem:[%s275 + $0x18] sm:$0xff] %v547
        %559 = vst [vmem:[%s282] sm:$0xff] %v551
        %560 = vst [vmem:[%s282 + $0x8] sm:$0xff] %v553
        %s561 = sand.u32 %s158, 1
        %s562 = scalar_lea.sflag [#allocation3], %s561
        %s563 = sand.u32 %s158, 1
        %s564 = smul.addr %s563, 32
        %s565 = scalar_lea.vmem [#allocation2], %s564
        %s566 = sand.u32 %s186, 1
        %s567 = scalar_lea.sflag [#allocation5], %s566
        %s568 = sand.u32 %s186, 1
        %s569 = smul.addr %s568, 16
        %s570 = scalar_lea.vmem [#allocation4], %s569
        // Predicated region
        $region41: #{tpu_custom_call.1} parent=39 // pred_check
          %p571 = pneg %p168
        $region42: #{tpu_custom_call.1} parent=39 // pred_check_branch
          %573 = sbr.rel (%p571) target = $region44
        $region43: #{tpu_custom_call.1} parent=39 // pred_region
          %s574 = smul.u32 2, %s29
          %s576 = ssub.s32 512, 512
          %577 = vsyncadd %s562, %s576
          %s578 = smul.addr %s28, 4
          %s579 = sadd.s32 %s574, %s578
          %s580 = smul.addr %s579, 128
          %s581 = scalar_lea.hbm %s5, %s580
          %s582 = sshll.u32 %s565, 4
          %s583 = int_to_ptr.vmem [resolvable:$true] %s582
          %588 = dma.vmem_to_hbm [thread:$0]  %s583, 512, %s581, %s562, 256, 256, 16
        $region44: #{tpu_custom_call.1} parent=39 // pred_fallthru
          _
        // Predicated region
        $region45: #{tpu_custom_call.1} parent=39 // pred_check
          %p589 = pneg %p196
        $region46: #{tpu_custom_call.1} parent=39 // pred_check_branch
          %591 = sbr.rel (%p589) target = $region48
        $region47: #{tpu_custom_call.1} parent=39 // pred_region
          %s592 = smul.u32 2, %s29
          %s594 = ssub.s32 256, 256
          %595 = vsyncadd %s567, %s594
          %s596 = smul.addr %s28, 2
          %s597 = sadd.s32 %s592, %s596
          %s598 = smul.addr %s597, 128
          %s599 = scalar_lea.hbm %s6, %s598
          %s601 = sshll.u32 %s570, 4
          %s602 = int_to_ptr.vmem [resolvable:$true] %s601
          %604 = dma.vmem_to_hbm [thread:$0]  %s602, 256, %s599, %s567
        $region48: #{tpu_custom_call.1} parent=39 // pred_fallthru
          _
      $region40: #{tpu_custom_call.1} parent=5 // pred_fallthru
        _
      %p605 = scmp.le.s32.totalorder 2, %s19
      // Predicated region
      $region49: #{tpu_custom_call.1} parent=5 // pred_check
        %p606 = pneg %p605
      $region50: #{tpu_custom_call.1} parent=5 // pred_check_branch
        %608 = sbr.rel (%p606) target = $region52
      $region51: #{tpu_custom_call.1} parent=5 // pred_region
        %s609 = ssub.s32 %s19, 2
        // Predicated region
        $region53: #{tpu_custom_call.1} parent=51 // pred_check
          %p610 = pneg %p174
        $region54: #{tpu_custom_call.1} parent=51 // pred_check_branch
          %612 = sbr.rel (%p610) target = $region56
        $region55: #{tpu_custom_call.1} parent=51 // pred_region
          %s613 = sand.u32 %s159, 1
          %s614 = scalar_lea.sflag [#allocation3], %s613
          %s615 = sand.u32 %s159, 1
          %s616 = smul.addr %s615, 32
          %s617 = scalar_lea.vmem [#allocation2], %s616
          %618 = dma.done %s614, 512
        $region56: #{tpu_custom_call.1} parent=51 // pred_fallthru
          _
        // Predicated region
        $region57: #{tpu_custom_call.1} parent=51 // pred_check
          %p619 = pneg %p202
        $region58: #{tpu_custom_call.1} parent=51 // pred_check_branch
          %621 = sbr.rel (%p619) target = $region60
        $region59: #{tpu_custom_call.1} parent=51 // pred_region
          %s622 = sand.u32 %s187, 1
          %s623 = scalar_lea.sflag [#allocation5], %s622
          %s624 = sand.u32 %s187, 1
          %s625 = smul.addr %s624, 16
          %s626 = scalar_lea.vmem [#allocation4], %s625
          %627 = dma.done %s623, 256
        $region60: #{tpu_custom_call.1} parent=51 // pred_fallthru
          _
      $region52: #{tpu_custom_call.1} parent=5 // pred_fallthru
        _
    $region6: #{tpu_custom_call.1} parent=1 // loop_footer
      %s23 = sadd.s32 1, %s19
    $region7: #{tpu_custom_call.1} parent=1 // loop_footer_branch
      %18 = sbr.rel target = $region3
    $region8: #{tpu_custom_call.1} parent=1 // loop_exit
      _
    %628 = vsyncpa [#allocation3], 1
    %s629 = scalar_lea.sflag [#allocation3], 1
    %630 = vsyncpa %s629, 1
    %631 = vsyncpa [#allocation5], 1
    %s632 = scalar_lea.sflag [#allocation5], 1
    %633 = vsyncpa %s632, 1

</llo_original>
